<compile_context>
chip_gen: v5e
topology: v5e:2x2
jax: 0.10.0
libtpu: 0.0.40
codegen_flags: <defaults>
</compile_context>

<pallas_src>
import jax
import jax.numpy as jnp
from jax.experimental import pallas as pl
from jax.experimental.pallas import tpu as pltpu


def _round_up(x: int, m: int) -> int:
    return (x + m - 1) // m * m


def make_label_smooth_ce(num_classes, epsilon=0.1, tile_batch=None,
                         vmem_tile_bytes=8 * 1024 * 1024):
    """Returns forward(inputs, targets) computing the label-smoothed CE loss."""
    eps = float(epsilon)
    k = int(num_classes)

    def forward(inputs, targets):
        b, kk = inputs.shape
        assert kk == k, f"expected num_classes={k}, got {kk}"

        # ---- choose the batch tile (largest multiple of 8 within the budget) ----
        bytes_per_row = k * 4  # f32 logits
        if tile_batch is None:
            cap = max(8, (vmem_tile_bytes // bytes_per_row) // 8 * 8)
            tb = min(512, cap, _round_up(b, 8))
        else:
            tb = _round_up(int(tile_batch), 8)
        b_pad = _round_up(b, tb)
        num_tiles = b_pad // tb
        needs_mask = b_pad != b
        inv_b = 1.0 / float(b)

        logits = inputs.astype(jnp.float32)
        tgt = targets.astype(jnp.int32).reshape(b, 1)
        if needs_mask:
            logits = jnp.pad(logits, ((0, b_pad - b), (0, 0)))
            tgt = jnp.pad(tgt, ((0, b_pad - b), (0, 0)))

        def kernel(logits_ref, targets_ref, out_ref, acc_ref):
            i = pl.program_id(0)

            @pl.when(i == 0)
            def _():
                acc_ref[0] = jnp.float32(0.0)

            x = logits_ref[...]                   # (TB, K) f32
            t = targets_ref[...]                  # (TB, 1) i32

            # Numerically-stable shifted logits + logsumexp over classes.
            m = jnp.max(x, axis=1, keepdims=True)         # (TB, 1)
            z = x - m
            lse = jnp.log(jnp.sum(jnp.exp(z), axis=1, keepdims=True))

            # Gather z[i, t_i] via lane-iota compare; uniform term via row sum.
            class_ids = jax.lax.broadcasted_iota(jnp.int32, z.shape, 1)
            z_tgt = jnp.sum(jnp.where(class_ids == t, z, 0.0),
                            axis=1, keepdims=True)        # (TB, 1)
            z_sum = jnp.sum(z, axis=1, keepdims=True)      # (TB, 1)

            # loss_i = lse_i - (1-eps)*z[i,t_i] - (eps/K)*sum_j z[i,j]
            per_row = lse - (1.0 - eps) * z_tgt - (eps / k) * z_sum

            if needs_mask:  # zero out padded batch rows (static python branch)
                row_ids = i * tb + jax.lax.broadcasted_iota(
                    jnp.int32, per_row.shape, 0)
                per_row = jnp.where(row_ids < b, per_row, 0.0)

            acc_ref[0] += jnp.sum(per_row)

            @pl.when(i == pl.num_programs(0) - 1)
            def _():
                out_ref[0] = acc_ref[0] * jnp.float32(inv_b)

        out = pl.pallas_call(
            kernel,
            out_shape=jax.ShapeDtypeStruct((1,), jnp.float32),
            grid=(num_tiles,),
            in_specs=[
                pl.BlockSpec((tb, k), lambda i: (i, 0)),
                pl.BlockSpec((tb, 1), lambda i: (i, 0)),
            ],
            out_specs=pl.BlockSpec(memory_space=pltpu.MemorySpace.SMEM),
            scratch_shapes=[pltpu.SMEM((1,), jnp.float32)],
            compiler_params=pltpu.CompilerParams(
                dimension_semantics=("arbitrary",),   # sequential accumulation
                vmem_limit_bytes=64 * 1024 * 1024,
            ),
        )(logits, tgt)
        return out[0]

    return forward


def _reference(logits, targets, num_classes, epsilon):
    """Pure-JAX mirror of the PyTorch forward."""
    log_probs = jax.nn.log_softmax(logits.astype(jnp.float32), axis=1)
    onehot = jax.nn.one_hot(targets, num_classes, dtype=jnp.float32)
    smooth = (1.0 - epsilon) * onehot + epsilon / num_classes
    return jnp.sum(jnp.mean(-smooth * log_probs, axis=0))


if __name__ == "__main__":
    key = jax.random.PRNGKey(0)
    k1, k2, k3, k4 = jax.random.split(key, 4)

    # Case 1: the shapes implied by the module (batch, num_classes).
    num_classes, batch, epsilon = 16, 8, 0.1
    logits = jax.random.normal(k1, (batch, num_classes), dtype=jnp.float32)
    targets = jax.random.randint(k2, (batch,), 0, num_classes, dtype=jnp.int32)

    ce = make_label_smooth_ce(num_classes, epsilon)
    loss = ce(logits, targets)
    jax.block_until_ready(loss)
    ref = _reference(logits, targets, num_classes, epsilon)
    assert jnp.allclose(loss, ref, rtol=1e-5, atol=1e-5), (loss, ref)

    # Case 2: exercise the multi-tile + padded-batch path (TB=8 -> 3 tiles, 4 masked rows).
    batch2, classes2 = 20, 32
    logits2 = jax.random.normal(k3, (batch2, classes2), dtype=jnp.float32)
    targets2 = jax.random.randint(k4, (batch2,), 0, classes2, dtype=jnp.int32)
    ce2 = make_label_smooth_ce(classes2, epsilon, tile_batch=8)
    loss2 = ce2(logits2, targets2)
    jax.block_until_ready(loss2)
    ref2 = _reference(logits2, targets2, classes2, epsilon)
    assert jnp.allclose(loss2, ref2, rtol=1e-5, atol=1e-5), (loss2, ref2)

    print("KERNEL_OK")
</pallas_src>

<mosaic_0001>
module attributes {stable_mosaic.version = 11 : i64} {
  func.func @kernel(%arg0: i32, %arg1: memref<8x16xf32, #tpu.memory_space<vmem>>, %arg2: memref<8x1xi32, #tpu.memory_space<vmem>>, %arg3: memref<1xf32, #tpu.memory_space<smem>>, %arg4: memref<1xf32, #tpu.memory_space<smem>>) attributes {dimension_semantics = [#tpu.dimension_semantics<arbitrary>], iteration_bounds = array<i64: 1>, scalar_prefetch = 0 : i64, scratch_operands = 1 : i64, tpu.core_type = #tpu.core_type<tc>, window_params = [{transform_indices = @transform_0, window_bounds = array<i64: 8, 16>}, {transform_indices = @transform_1, window_bounds = array<i64: 8, 1>}, {transform_indices = @transform_2, window_bounds = array<i64: 1>}]} {
    %c0_i32 = arith.constant 0 : i32
    %0 = arith.cmpi eq, %arg0, %c0_i32 : i32
    %1 = arith.extui %0 : i1 to i32
    %c0_i32_0 = arith.constant 0 : i32
    %2 = arith.cmpi ne, %1, %c0_i32_0 : i32
    scf.if %2 {
      %cst_15 = arith.constant 0.000000e+00 : f32
      %c0_16 = arith.constant 0 : index
      %38 = memref.load %arg4[%c0_16] : memref<1xf32, #tpu.memory_space<smem>>
      memref.store %cst_15, %arg4[%c0_16] : memref<1xf32, #tpu.memory_space<smem>>
    } else {
    }
    %c0 = arith.constant 0 : index
    %c0_1 = arith.constant 0 : index
    %3 = vector.load %arg1[%c0, %c0_1] : memref<8x16xf32, #tpu.memory_space<vmem>>, vector<8x16xf32>
    %c0_2 = arith.constant 0 : index
    %c0_3 = arith.constant 0 : index
    %4 = vector.load %arg2[%c0_2, %c0_3] : memref<8x1xi32, #tpu.memory_space<vmem>>, vector<8x1xi32>
    %cst = arith.constant dense<0xFF800000> : vector<8xf32>
    %5 = vector.multi_reduction <maximumf>, %3, %cst [1] : vector<8x16xf32> to vector<8xf32>
    %6 = vector.shape_cast %5 : vector<8xf32> to vector<8x1xf32>
    %7 = vector.broadcast %6 : vector<8x1xf32> to vector<8x16xf32>
    %8 = arith.subf %3, %7 : vector<8x16xf32>
    %9 = math.exp %8 : vector<8x16xf32>
    %cst_4 = arith.constant dense<0.000000e+00> : vector<8xf32>
    %10 = vector.multi_reduction <add>, %9, %cst_4 [1] : vector<8x16xf32> to vector<8xf32>
    %11 = vector.shape_cast %10 : vector<8xf32> to vector<8x1xf32>
    %12 = math.log %11 : vector<8x1xf32>
    %13 = tpu.iota {dimensions = array<i32: 1>} : vector<8x16xi32>
    %14 = vector.broadcast %4 : vector<8x1xi32> to vector<8x16xi32>
    %15 = arith.cmpi eq, %13, %14 : vector<8x16xi32>
    %cst_5 = arith.constant 0.000000e+00 : f32
    %16 = vector.broadcast %cst_5 : f32 to vector<8x16xf32>
    %17 = arith.select %15, %8, %16 : vector<8x16xi1>, vector<8x16xf32>
    %cst_6 = arith.constant dense<0.000000e+00> : vector<8xf32>
    %18 = vector.multi_reduction <add>, %17, %cst_6 [1] : vector<8x16xf32> to vector<8xf32>
    %19 = vector.shape_cast %18 : vector<8xf32> to vector<8x1xf32>
    %cst_7 = arith.constant dense<0.000000e+00> : vector<8xf32>
    %20 = vector.multi_reduction <add>, %8, %cst_7 [1] : vector<8x16xf32> to vector<8xf32>
    %21 = vector.shape_cast %20 : vector<8xf32> to vector<8x1xf32>
    %cst_8 = arith.constant 0.899999976 : f32
    %22 = vector.broadcast %cst_8 : f32 to vector<8x1xf32>
    %23 = arith.mulf %22, %19 : vector<8x1xf32>
    %24 = arith.subf %12, %23 : vector<8x1xf32>
    %cst_9 = arith.constant 6.250000e-03 : f32
    %25 = vector.broadcast %cst_9 : f32 to vector<8x1xf32>
    %26 = arith.mulf %25, %21 : vector<8x1xf32>
    %27 = arith.subf %24, %26 : vector<8x1xf32>
    %c0_10 = arith.constant 0 : index
    %28 = memref.load %arg4[%c0_10] : memref<1xf32, #tpu.memory_space<smem>>
    %29 = vector.shape_cast %27 : vector<8x1xf32> to vector<1x8x1xf32>
    %cst_11 = arith.constant dense<0.000000e+00> : vector<1xf32>
    %30 = vector.multi_reduction <add>, %29, %cst_11 [1, 2] : vector<1x8x1xf32> to vector<1xf32>
    %31 = vector.shape_cast %30 : vector<1xf32> to vector<1x1x1xf32>
    %32 = vector.extract %31[0, 0, 0] : f32 from vector<1x1x1xf32>
    %33 = arith.addf %28, %32 : f32
    %c0_12 = arith.constant 0 : index
    %34 = memref.load %arg4[%c0_12] : memref<1xf32, #tpu.memory_space<smem>>
    memref.store %33, %arg4[%c0_12] : memref<1xf32, #tpu.memory_space<smem>>
    %c0_i32_13 = arith.constant 0 : i32
    %35 = arith.cmpi eq, %arg0, %c0_i32_13 : i32
    %36 = arith.extui %35 : i1 to i32
    %c0_i32_14 = arith.constant 0 : i32
    %37 = arith.cmpi ne, %36, %c0_i32_14 : i32
    scf.if %37 {
      %c0_15 = arith.constant 0 : index
      %38 = memref.load %arg4[%c0_15] : memref<1xf32, #tpu.memory_space<smem>>
      %cst_16 = arith.constant 1.250000e-01 : f32
      %39 = arith.mulf %38, %cst_16 : f32
      %c0_17 = arith.constant 0 : index
      %40 = memref.load %arg3[%c0_17] : memref<1xf32, #tpu.memory_space<smem>>
      memref.store %39, %arg3[%c0_17] : memref<1xf32, #tpu.memory_space<smem>>
    } else {
    }
    return
  }
  func.func @transform_0(%arg0: i32) -> (i32, i32) {
    %c0_i32 = arith.constant 0 : i32
    %c0_i32_0 = arith.constant 0 : i32
    return %arg0, %c0_i32 : i32, i32
  }
  func.func @transform_1(%arg0: i32) -> (i32, i32) {
    %c0_i32 = arith.constant 0 : i32
    %c0_i32_0 = arith.constant 0 : i32
    return %arg0, %c0_i32 : i32, i32
  }
  func.func @transform_2(%arg0: i32) -> i32 {
    %c0_i32 = arith.constant 0 : i32
    %c0_i32_0 = arith.constant 0 : i32
    return %c0_i32 : i32
  }
}

</mosaic_0001>

<llo_original>
// kernel: tpu_custom_call.1
$region0: #{tpu_custom_call.1}
  #allocation0 [shape = 'u32[]', space=smem, size = 0x4, offset = 0x4, fixed_abs, tag = 'smem constant byte address 0x4 - core index']
  #allocation1 [shape = 'u32[72,128]{1,0:T(1,128)}', space=vmem, size = 0x9000, scoped, tag = 'internal scratch']
  #allocation2 [shape = 'f32[1]{0:T(128)}', space=smem, size = 0x200, scoped, tag = 'scratch operand']
  %s0 = inlined_call_operand.vmem [shape: f32[8,16], index: 0, kind: input, shape index: {}]
  %s1 = inlined_call_operand.vmem [shape: s32[8,1], index: 1, kind: input, shape index: {}]
  %s2 = inlined_call_operand.hbm [shape: f32[1], index: 2, kind: output, shape index: {}]
  %s3 = sld [smem:[#allocation0]]
  $region26: #{tpu_custom_call.1} parent=0
    _
  %s5 = ssub.s32 1, %s3
  %s6 = scalar_select 0, %s5, %s3
  $region1: #{tpu_custom_call.1} parent=0
    #allocation3 [shape = 'u8[512]{0}', space=smem, size = 0x200, scoped, tag = 'output window, operand 0, single buffered']
    #allocation4 [shape = 's32[1]{0}', space=sflag, size = 0x4, scoped, tag = 'scoped memory for tpu_custom_call.1']
    %7 = vsyncpa [#allocation4], 0
    // Predicated region
    $region2: #{tpu_custom_call.1} parent=1 // pred_check
      _
    $region3: #{tpu_custom_call.1} parent=1 // pred_check_branch
      %9 = sbr.rel (0) target = $region5
    $region4: #{tpu_custom_call.1} parent=1 // pred_region
      _
    $region5: #{tpu_custom_call.1} parent=1 // pred_fallthru
      _
    // Predicated region
    $region6: #{tpu_custom_call.1} parent=1 // pred_check
      _
    $region7: #{tpu_custom_call.1} parent=1 // pred_check_branch
      %11 = sbr.rel (0) target = $region9
    $region8: #{tpu_custom_call.1} parent=1 // pred_region
      _
    $region9: #{tpu_custom_call.1} parent=1 // pred_fallthru
      _
    %p12 = scmp.eq.s32.totalorder 0, 0
    // Predicated region
    $region10: #{tpu_custom_call.1} parent=1 // pred_check
      %p13 = pneg %p12
    $region11: #{tpu_custom_call.1} parent=1 // pred_check_branch
      %15 = sbr.rel (%p13) target = $region13
    $region12: #{tpu_custom_call.1} parent=1 // pred_region
      %s16 = scalar_lea.smem [#allocation2], 0
      %17 = sst [smem:[%s16]] 0.0
    $region13: #{tpu_custom_call.1} parent=1 // pred_fallthru
      _
    %v18 = vld [vmem:[%s0] sm:$0xff]
    %v19 = vld [vmem:[%s1] sm:$0xff]
    %vm20 = vcmask 130048
    %v21 = vsel %vm20, %v18, -inf
    %22 = vmax.xlane.f32.xlu0 %v21
    %v23 = vpop.xlane.xlu0 %22
    %v24 = vsub.f32 %v18, %v23
    %v25 = vmul.f32 %v24, 1.442695
    %v26 = vpow.pop %v25
    %v27 = vsel %vm20, %v26, 0.0
    %28 = vadd.xlane.f32.xlu0 %v27
    %v29 = vpop.xlane.xlu0 %28
    %v30 = vlog2.pop %v29
    %v31 = vmul.f32 %v30, 0.6931472
    %v32 = vlaneseq
    %v33 = vand.u32 %v32, 127
    %34 = vset.pattern.permute.xlu0 0
    %35 = vperm.xlu0 %34, %v19
    %v36 = vpop.permute.xlu0 %35
    %vm37 = vcmp.eq.s32.totalorder %v33, %v36
    %v38 = vsel %vm37, %v24, 0.0
    %v39 = vsel %vm20, %v38, 0.0
    %40 = vadd.xlane.f32.xlu0 %v39
    %v41 = vpop.xlane.xlu0 %40
    %v42 = vsel %vm20, %v24, 0.0
    %43 = vadd.xlane.f32.xlu0 %v42
    %v44 = vpop.xlane.xlu0 %43
    %v45 = vmul.f32 %v41, 0.9
    %v46 = vsub.f32 %v31, %v45
    %v47 = vmul.f32 %v44, 0.00625
    %v48 = vsub.f32 %v46, %v47
    %s49 = sld [smem:[#allocation2]]
    %vm50 = vcmask 7168
    %v51 = vsel %vm50, %v48, 0.0
    %52 = vadd.xlane.f32.xlu0 %v51
    %v53 = vpop.xlane.xlu0 %52
    %v54 = vrot.slane %v53, 4
    %v55 = vadd.f32 %v53, %v54
    %v56 = vrot.slane %v55, 2
    %v57 = vadd.f32 %v55, %v56
    %v58 = vrot.slane %v57, 1
    %v59 = vadd.f32 %v57, %v58
    %s60 = vtos %v59
    %s61 = sadd.f32 %s49, %s60
    %s62 = scalar_lea.smem [#allocation2], 0
    %63 = sst [smem:[%s62]] %s61
    // Predicated region
    $region14: #{tpu_custom_call.1} parent=1 // pred_check
      %p64 = pneg %p12
    $region15: #{tpu_custom_call.1} parent=1 // pred_check_branch
      %66 = sbr.rel (%p64) target = $region17
    $region16: #{tpu_custom_call.1} parent=1 // pred_region
      %s67 = sld [smem:[#allocation2]]
      %s68 = smul.f32 %s67, 0.125
      %s69 = scalar_lea.smem [#allocation3], 0
      %70 = sst [smem:[%s69]] %s68
    $region17: #{tpu_custom_call.1} parent=1 // pred_fallthru
      _
    // Predicated region
    $region18: #{tpu_custom_call.1} parent=1 // pred_check
      _
    $region19: #{tpu_custom_call.1} parent=1 // pred_check_branch
      %72 = sbr.rel (0) target = $region21
    $region20: #{tpu_custom_call.1} parent=1 // pred_region
      %74 = vsyncadd [#allocation4], 0
      %s76 = sshll.u32 %s2, 4
      %s77 = int_to_ptr.hbm [resolvable:$true] %s76
      %79 = dma.smem_to_hbm [#allocation3], 16, %s77, [#allocation4]
    $region21: #{tpu_custom_call.1} parent=1 // pred_fallthru
      _
    // Predicated region
    $region22: #{tpu_custom_call.1} parent=1 // pred_check
      _
    $region23: #{tpu_custom_call.1} parent=1 // pred_check_branch
      %81 = sbr.rel (0) target = $region25
    $region24: #{tpu_custom_call.1} parent=1 // pred_region
      %83 = dma.done [#allocation4], 16
    $region25: #{tpu_custom_call.1} parent=1 // pred_fallthru
      _
    %84 = sfence
    %85 = vsyncpa [#allocation4], 1

</llo_original>
